<compile_context>
chip_gen: v6e
topology: v6e:2x2x1
jax: 0.10.0
libtpu: 0.0.40
codegen_flags: <defaults>
</compile_context>

<pallas_src>
import functools

import jax
import jax.numpy as jnp
from jax import lax
from jax.experimental import pallas as pl
from jax.experimental.pallas import tpu as pltpu


MXU_DTYPE = jnp.bfloat16


# ----------------------------------------------------------------------------
# Parameter preparation (done ONCE, outside the per-evaluation / per-step call)
# ----------------------------------------------------------------------------
def init_odefunc_params(key, n_feat, n_neurons, dtype=jnp.float32):
    """Deterministic init mirroring the PyTorch module:
    weights ~ Normal(0, 0.1), biases = 0 (weights stored as (in, out))."""
    k1, k2 = jax.random.split(key)
    w1 = (0.1 * jax.random.normal(k1, (n_feat, n_neurons))).astype(dtype)
    b1 = jnp.zeros((n_neurons,), dtype=dtype)
    w2 = (0.1 * jax.random.normal(k2, (n_neurons, n_feat))).astype(dtype)
    b2 = jnp.zeros((n_feat,), dtype=dtype)
    return w1, b1, w2, b2


def prepare_params(w1, b1, w2, b2, mxu_dtype=MXU_DTYPE):
    """One-time prep: cast weights to the MXU input dtype and reshape biases
    to (1, n) f32 rows.  Invariant across ODE steps, so never redo per call."""
    F, H = w1.shape
    assert w2.shape == (H, F) and b1.shape == (H,) and b2.shape == (F,)
    return (w1.astype(mxu_dtype),
            b1.astype(jnp.float32).reshape(1, H),
            w2.astype(mxu_dtype),
            b2.astype(jnp.float32).reshape(1, F))


# ----------------------------------------------------------------------------
# Tiling heuristics
# ----------------------------------------------------------------------------
def _pick_batch_tile(B):
    # v7x megacore wants >=2 grid steps per TensorCore -> 4 steps when the
    # batch is big enough and evenly divisible (tiles stay multiples of 32
    # rows, so bf16 sublane packing is clean).  Otherwise a single full-batch
    # step: on v5e/v6e the whole problem is <1 MiB, so per-grid-step overhead
    # (~0.35 us) costs more than the pipelining it buys.
    if B >= 512 and B % 128 == 0:
        return max(128, B // 4)
    return B


def _vmem_limit(batch_tile, F, H, io_bytes):
    est = (2 * batch_tile * F * io_bytes        # y tiles, double-buffered
           + 2 * batch_tile * F * io_bytes      # out tiles, double-buffered
           + 2 * (F * H + H * F) * 2            # W1/W2 bf16 buffers
           + 2 * (F + H) * 4                    # biases (f32)
           + batch_tile * H * 4)                # h intermediate (f32)
    return int(min(max(2 * est + (1 << 20), 2 << 20), 32 << 20))


# ----------------------------------------------------------------------------
# Kernel 1: single f(t, y) evaluation  (== ODEFunc.forward)
# ----------------------------------------------------------------------------
def _odefunc_kernel(y_ref, w1_ref, b1_ref, w2_ref, b2_ref, o_ref, *,
                    sub_tile, n_sub):
    # Constant index_map -> weights/biases stay resident in VMEM across steps.
    w1 = w1_ref[...]
    b1 = b1_ref[...]
    w2 = w2_ref[...]
    b2 = b2_ref[...]

    def eval_rows(row):
        y = y_ref[pl.ds(row, sub_tile), :].astype(w1.dtype)   # cast in-kernel
        h = jnp.dot(y, w1, preferred_element_type=jnp.float32)
        h = jnp.tanh(h + b1)                                   # f32 epilogue
        out = jnp.dot(h.astype(w2.dtype), w2,
                      preferred_element_type=jnp.float32) + b2
        o_ref[pl.ds(row, sub_tile), :] = out.astype(o_ref.dtype)

    if n_sub == 1:
        eval_rows(0)
    else:
        def body(s, carry):
            eval_rows(pl.multiple_of(s * sub_tile, sub_tile))
            return carry
        # Cap the unroll so vreg pressure stays bounded.
        lax.fori_loop(0, n_sub, body, 0, unroll=(n_sub <= 4))


def odefunc_forward(t, y, w1, b1, w2, b2, *, batch_tile=None):
    """Pallas-fused ODEFunc.forward: tanh(y@W1+b1)@W2+b2.  `t` is ignored
    (matches PyTorch).  Expects params from prepare_params()."""
    del t
    B, F = y.shape
    Fw, H = w1.shape
    assert Fw == F and w2.shape == (H, F)
    assert b1.shape == (1, H) and b2.shape == (1, F)

    if batch_tile is None or B % batch_tile != 0:
        batch_tile = _pick_batch_tile(B)
    sub_tile = 128 if batch_tile % 128 == 0 else batch_tile
    n_sub = batch_tile // sub_tile

    io_bytes = jnp.dtype(y.dtype).itemsize
    cost = pl.CostEstimate(
        flops=4 * B * F * H,                       # two matmuls
        transcendentals=B * H,                     # tanh
        bytes_accessed=(2 * B * F * io_bytes       # y read + out write
                        + 2 * F * H * 2 + (F + H) * 4),
    )

    return pl.pallas_call(
        functools.partial(_odefunc_kernel, sub_tile=sub_tile, n_sub=n_sub),
        out_shape=jax.ShapeDtypeStruct((B, F), y.dtype),
        grid_spec=pltpu.PrefetchScalarGridSpec(
            num_scalar_prefetch=0,
            grid=(B // batch_tile,),
            in_specs=[
                pl.BlockSpec((batch_tile, F), lambda i: (i, 0)),  # y tile
                pl.BlockSpec((F, H), lambda i: (0, 0)),           # W1 (resident)
                pl.BlockSpec((1, H), lambda i: (0, 0)),           # b1
                pl.BlockSpec((H, F), lambda i: (0, 0)),           # W2 (resident)
                pl.BlockSpec((1, F), lambda i: (0, 0)),           # b2
            ],
            out_specs=pl.BlockSpec((batch_tile, F), lambda i: (i, 0)),
        ),
        compiler_params=pltpu.CompilerParams(
            dimension_semantics=("parallel",),
            vmem_limit_bytes=_vmem_limit(batch_tile, F, H, io_bytes),
        ),
        cost_estimate=cost,
    )(y, w1, b1, w2, b2)


# ----------------------------------------------------------------------------
# Kernel 2: whole fixed-step Euler solve fused in ONE pallas_call
#           (weights DMA'd once, resident in VMEM across all steps)
# ----------------------------------------------------------------------------
def _ode_euler_kernel(y0_ref, w1_ref, b1_ref, w2_ref, b2_ref, y_out_ref, *,
                      n_steps, dt):
    w1 = w1_ref[...]
    b1 = b1_ref[...]
    w2 = w2_ref[...]
    b2 = b2_ref[...]

    def step(_, y):
        h = jnp.tanh(jnp.dot(y.astype(w1.dtype), w1,
                             preferred_element_type=jnp.float32) + b1)
        f = jnp.dot(h.astype(w2.dtype), w2,
                    preferred_element_type=jnp.float32) + b2
        return y + dt * f

    y = lax.fori_loop(0, n_steps, step, y0_ref[...].astype(jnp.float32),
                      unroll=False)
    y_out_ref[...] = y.astype(y_out_ref.dtype)


def odefunc_integrate(y0, w1, b1, w2, b2, *, dt, n_steps, batch_tile=None):
    """y_{k+1} = y_k + dt * ODEFunc(t, y_k), n_steps times, fully fused."""
    B, F = y0.shape
    Fw, H = w1.shape
    assert Fw == F and w2.shape == (H, F)
    assert b1.shape == (1, H) and b2.shape == (1, F)

    if batch_tile is None or B % batch_tile != 0:
        batch_tile = _pick_batch_tile(B)

    io_bytes = jnp.dtype(y0.dtype).itemsize
    cost = pl.CostEstimate(
        flops=(4 * B * F * H + 2 * B * F) * n_steps,
        transcendentals=B * H * n_steps,
        bytes_accessed=(2 * B * F * io_bytes + 2 * F * H * 2 + (F + H) * 4),
    )

    return pl.pallas_call(
        functools.partial(_ode_euler_kernel, n_steps=int(n_steps), dt=float(dt)),
        out_shape=jax.ShapeDtypeStruct((B, F), y0.dtype),
        grid_spec=pltpu.PrefetchScalarGridSpec(
            num_scalar_prefetch=0,
            grid=(B // batch_tile,),
            in_specs=[
                pl.BlockSpec((batch_tile, F), lambda i: (i, 0)),  # y0 tile
                pl.BlockSpec((F, H), lambda i: (0, 0)),           # W1 (resident)
                pl.BlockSpec((1, H), lambda i: (0, 0)),           # b1
                pl.BlockSpec((H, F), lambda i: (0, 0)),           # W2 (resident)
                pl.BlockSpec((1, F), lambda i: (0, 0)),           # b2
            ],
            out_specs=pl.BlockSpec((batch_tile, F), lambda i: (i, 0)),
        ),
        compiler_params=pltpu.CompilerParams(
            dimension_semantics=("parallel",),
            vmem_limit_bytes=_vmem_limit(batch_tile, F, H, io_bytes),
        ),
        cost_estimate=cost,
    )(y0, w1, b1, w2, b2)


# ----------------------------------------------------------------------------
if __name__ == "__main__":
    key = jax.random.PRNGKey(0)
    k_params, k_y = jax.random.split(key)

    # Small shapes consistent with the module: y is (batch, N_feat).
    batch, n_feat, n_neurons = 512, 32, 64

    w1, b1, w2, b2 = init_odefunc_params(k_params, n_feat, n_neurons)
    params = prepare_params(w1, b1, w2, b2)        # once, outside per-step calls
    y = jax.random.normal(k_y, (batch, n_feat), dtype=jnp.float32)
    t = jnp.float32(0.0)                           # unused, matches PyTorch

    # ---- single f(t, y) evaluation (== ODEFunc.forward) ----
    fwd = jax.jit(lambda t_, y_: odefunc_forward(t_, y_, *params))
    out = jax.block_until_ready(fwd(t, y))
    assert out.shape == (batch, n_feat)

    # Matched-precision reference (same bf16 MXU inputs, f32 accumulation).
    cd = MXU_DTYPE
    h_ref = jnp.tanh(jnp.dot(y.astype(cd), w1.astype(cd),
                             preferred_element_type=jnp.float32) + b1)
    ref = jnp.dot(h_ref.astype(cd), w2.astype(cd),
                  preferred_element_type=jnp.float32) + b2
    assert jnp.allclose(out, ref, atol=2e-3, rtol=2e-3), \
        float(jnp.max(jnp.abs(out - ref)))

    # Loose sanity check against the full-f32 math of the PyTorch module.
    ref_f32 = jnp.tanh(y @ w1 + b1) @ w2 + b2
    assert jnp.allclose(out, ref_f32, atol=5e-2, rtol=5e-2)

    # ---- fused fixed-step Euler integration (solver loop inside the kernel) ----
    dt, n_steps = 0.05, 16
    integ = jax.jit(lambda y_: odefunc_integrate(y_, *params, dt=dt,
                                                 n_steps=n_steps))
    y_T = jax.block_until_ready(integ(y))
    assert y_T.shape == (batch, n_feat)

    y_ref_T = y
    for _ in range(n_steps):
        h_s = jnp.tanh(jnp.dot(y_ref_T.astype(cd), w1.astype(cd),
                               preferred_element_type=jnp.float32) + b1)
        f_s = jnp.dot(h_s.astype(cd), w2.astype(cd),
                      preferred_element_type=jnp.float32) + b2
        y_ref_T = y_ref_T + dt * f_s
    assert jnp.allclose(y_T, y_ref_T, atol=1e-2, rtol=1e-2), \
        float(jnp.max(jnp.abs(y_T - y_ref_T)))

    print("KERNEL_OK")
</pallas_src>

<mosaic_0001>
module attributes {stable_mosaic.version = 11 : i64} {
  func.func @_odefunc_kernel(%arg0: i32, %arg1: memref<128x32xf32, #tpu.memory_space<vmem>>, %arg2: memref<32x64xbf16, #tpu.memory_space<vmem>>, %arg3: memref<1x64xf32, #tpu.memory_space<vmem>>, %arg4: memref<64x32xbf16, #tpu.memory_space<vmem>>, %arg5: memref<1x32xf32, #tpu.memory_space<vmem>>, %arg6: memref<128x32xf32, #tpu.memory_space<vmem>>) attributes {dimension_semantics = [#tpu.dimension_semantics<parallel>], iteration_bounds = array<i64: 4>, scalar_prefetch = 0 : i64, scratch_operands = 0 : i64, tpu.core_type = #tpu.core_type<tc>, window_params = [{transform_indices = @transform_0, window_bounds = array<i64: 128, 32>}, {pipeline_mode = #tpu.pipeline_mode<synchronous>, transform_indices = @transform_1, window_bounds = array<i64: 32, 64>}, {pipeline_mode = #tpu.pipeline_mode<synchronous>, transform_indices = @transform_2, window_bounds = array<i64: 1, 64>}, {pipeline_mode = #tpu.pipeline_mode<synchronous>, transform_indices = @transform_3, window_bounds = array<i64: 64, 32>}, {pipeline_mode = #tpu.pipeline_mode<synchronous>, transform_indices = @transform_4, window_bounds = array<i64: 1, 32>}, {transform_indices = @transform_5, window_bounds = array<i64: 128, 32>}]} {
    %c0 = arith.constant 0 : index
    %c0_0 = arith.constant 0 : index
    %0 = vector.load %arg2[%c0, %c0_0] : memref<32x64xbf16, #tpu.memory_space<vmem>>, vector<32x64xbf16>
    %c0_1 = arith.constant 0 : index
    %c0_2 = arith.constant 0 : index
    %1 = vector.load %arg3[%c0_1, %c0_2] : memref<1x64xf32, #tpu.memory_space<vmem>>, vector<1x64xf32>
    %c0_3 = arith.constant 0 : index
    %c0_4 = arith.constant 0 : index
    %2 = vector.load %arg4[%c0_3, %c0_4] : memref<64x32xbf16, #tpu.memory_space<vmem>>, vector<64x32xbf16>
    %c0_5 = arith.constant 0 : index
    %c0_6 = arith.constant 0 : index
    %3 = vector.load %arg5[%c0_5, %c0_6] : memref<1x32xf32, #tpu.memory_space<vmem>>, vector<1x32xf32>
    %c0_7 = arith.constant 0 : index
    %c0_8 = arith.constant 0 : index
    %4 = vector.load %arg1[%c0_7, %c0_8] : memref<128x32xf32, #tpu.memory_space<vmem>>, vector<128x32xf32>
    %5 = arith.truncf %4 : vector<128x32xf32> to vector<128x32xbf16>
    %cst = arith.constant dense<0.000000e+00> : vector<128x64xf32>
    %6 = tpu.matmul %5, %0, %cst {dimension_numbers = #tpu.dot_dimension_numbers<[1], [0], [0], [1], [0, 0, 1, 1], [], []>} : vector<128x32xbf16>, vector<32x64xbf16>, vector<128x64xf32> -> vector<128x64xf32>
    %7 = vector.broadcast %1 : vector<1x64xf32> to vector<128x64xf32>
    %8 = arith.addf %6, %7 : vector<128x64xf32>
    %9 = math.tanh %8 : vector<128x64xf32>
    %10 = arith.truncf %9 : vector<128x64xf32> to vector<128x64xbf16>
    %cst_9 = arith.constant dense<0.000000e+00> : vector<128x32xf32>
    %11 = tpu.matmul %10, %2, %cst_9 {dimension_numbers = #tpu.dot_dimension_numbers<[1], [0], [0], [1], [0, 0, 1, 1], [], []>} : vector<128x64xbf16>, vector<64x32xbf16>, vector<128x32xf32> -> vector<128x32xf32>
    %12 = vector.broadcast %3 : vector<1x32xf32> to vector<128x32xf32>
    %13 = arith.addf %11, %12 : vector<128x32xf32>
    %c0_10 = arith.constant 0 : index
    %c0_11 = arith.constant 0 : index
    %14 = vector.load %arg6[%c0_10, %c0_11] : memref<128x32xf32, #tpu.memory_space<vmem>>, vector<128x32xf32>
    tpu.vector_store %arg6[%c0_10, %c0_11], %13 {strides = array<i32>} : memref<128x32xf32, #tpu.memory_space<vmem>>, vector<128x32xf32>,
    return
  }
  func.func @transform_0(%arg0: i32) -> (i32, i32) {
    %c0_i32 = arith.constant 0 : i32
    %c0_i32_0 = arith.constant 0 : i32
    return %arg0, %c0_i32 : i32, i32
  }
  func.func @transform_1(%arg0: i32) -> (i32, i32) {
    %c0_i32 = arith.constant 0 : i32
    %c0_i32_0 = arith.constant 0 : i32
    %c0_i32_1 = arith.constant 0 : i32
    return %c0_i32, %c0_i32_0 : i32, i32
  }
  func.func @transform_2(%arg0: i32) -> (i32, i32) {
    %c0_i32 = arith.constant 0 : i32
    %c0_i32_0 = arith.constant 0 : i32
    %c0_i32_1 = arith.constant 0 : i32
    return %c0_i32, %c0_i32_0 : i32, i32
  }
  func.func @transform_3(%arg0: i32) -> (i32, i32) {
    %c0_i32 = arith.constant 0 : i32
    %c0_i32_0 = arith.constant 0 : i32
    %c0_i32_1 = arith.constant 0 : i32
    return %c0_i32, %c0_i32_0 : i32, i32
  }
  func.func @transform_4(%arg0: i32) -> (i32, i32) {
    %c0_i32 = arith.constant 0 : i32
    %c0_i32_0 = arith.constant 0 : i32
    %c0_i32_1 = arith.constant 0 : i32
    return %c0_i32, %c0_i32_0 : i32, i32
  }
  func.func @transform_5(%arg0: i32) -> (i32, i32) {
    %c0_i32 = arith.constant 0 : i32
    %c0_i32_0 = arith.constant 0 : i32
    return %arg0, %c0_i32 : i32, i32
  }
}

</mosaic_0001>

<llo_original>
// kernel: _lambda_.1
$region0: #{_lambda_.1}
  #allocation0 [shape = 'u32[]', space=smem, size = 0x4, offset = 0x4, fixed_abs, tag = 'smem constant byte address 0x4 - core index']
  #allocation1 [shape = 'u32[144,128]{1,0:T(1,128)}', space=vmem, size = 0x12000, scoped, tag = 'internal scratch']
  %s0 = inlined_call_operand.vmem [shape: f32[512,32], index: 0, kind: input, shape index: {}]
  %s1 = inlined_call_operand.vmem [shape: bf16[32,64], index: 1, kind: input, shape index: {}]
  %s2 = inlined_call_operand.vmem [shape: f32[1,64], index: 2, kind: input, shape index: {}]
  %s3 = inlined_call_operand.vmem [shape: bf16[64,32], index: 3, kind: input, shape index: {}]
  %s4 = inlined_call_operand.vmem [shape: f32[1,32], index: 4, kind: input, shape index: {}]
  %s5 = inlined_call_operand.vmem [shape: f32[512,32], index: 5, kind: output, shape index: {}]
  %s6 = sld [smem:[#allocation0]]
  $region53: #{_lambda_.1} parent=0
    _
  %s8 = ssub.s32 1, %s6
  %s9 = scalar_select 0, %s8, %s6
  loop: start=0, step=1, limit=6
  $region2: #{_lambda_.1} parent=0 // loop_pre_header
    _
  $region3: #{_lambda_.1} parent=0 // loop_header
    %s11 = sphi 0, %s15
    %p12 = scmp.ge.s32.totalorder %s11, 6
    %s21 = sphi 0, %s23
    %s24 = sphi 0, %s21
    %s25 = sphi 0, %s24
    %s41 = sphi 0, %s25
    %s45 = sphi 0, %s45
    %s47 = sphi 0, %s45
    %s48 = sphi 0, %s47
    %s62 = sphi 0, %s48
    %s66 = sphi 0, %s66
    %s68 = sphi 0, %s66
    %s69 = sphi 0, %s68
    %s83 = sphi 0, %s69
    %s87 = sphi 0, %s87
    %s89 = sphi 0, %s87
    %s90 = sphi 0, %s89
    %s104 = sphi 0, %s90
    %s108 = sphi 0, %s108
    %s110 = sphi 0, %s108
    %s111 = sphi 0, %s110
    %s125 = sphi 0, %s111
    %s131 = sphi 0, %s133
    %s134 = sphi 0, %s131
    %s135 = sphi 0, %s134
    %s151 = sphi 0, %s135
  $region4: #{_lambda_.1} parent=0 // loop_header_branch
    %14 = sbr.rel (%p12) target = $region8
  $region5: #{_lambda_.1} parent=0 // loop_body
    %s16 = ssub.s32 %s11, 1
    %s17 = ssub.s32 %s11, 2
    %s18 = sadd.s32 %s11, 1
    %s19 = ssub.s32 %s11, %s18
    %p20 = scmp.eq.s32.totalorder %s19, 0
    %s22 = sadd.s32 %s21, 1
    %s23 = scalar_select %p20, %s21, %s22
    %p26 = pneg %p20
    %p27 = scmp.eq.s32.totalorder %s11, 3
    %p28 = por %p26, %p27
    %p29 = scmp.ne.s32.totalorder %s21, %s24
    %p30 = scmp.eq.s32.totalorder %s11, 0
    %p31 = por %p29, %p30
    %p32 = scmp.ne.s32.totalorder %s21, %s24
    %p33 = scmp.eq.s32.totalorder %s16, 3
    %p34 = por %p32, %p33
    %p35 = scmp.ne.s32.totalorder %s24, %s25
    %p36 = scmp.eq.s32.totalorder %s16, 0
    %p37 = por %p35, %p36
    %p38 = scmp.ne.s32.totalorder %s24, %s25
    %p39 = scmp.eq.s32.totalorder %s17, 3
    %p40 = por %p38, %p39
    %p42 = scmp.ne.s32.totalorder %s25, %s41
    %p43 = scmp.eq.s32.totalorder %s17, 0
    %p44 = por %p42, %p43
    %s46 = sadd.s32 %s45, 1
    %p49 = scmp.eq.s32.totalorder %s11, 3
    %p50 = scmp.ne.s32.totalorder %s45, %s47
    %p51 = scmp.eq.s32.totalorder %s11, 0
    %p52 = por %p50, %p51
    %p53 = scmp.ne.s32.totalorder %s45, %s47
    %p54 = scmp.eq.s32.totalorder %s16, 3
    %p55 = por %p53, %p54
    %p56 = scmp.ne.s32.totalorder %s47, %s48
    %p57 = scmp.eq.s32.totalorder %s16, 0
    %p58 = por %p56, %p57
    %p59 = scmp.ne.s32.totalorder %s47, %s48
    %p60 = scmp.eq.s32.totalorder %s17, 3
    %p61 = por %p59, %p60
    %p63 = scmp.ne.s32.totalorder %s48, %s62
    %p64 = scmp.eq.s32.totalorder %s17, 0
    %p65 = por %p63, %p64
    %s67 = sadd.s32 %s66, 1
    %p70 = scmp.eq.s32.totalorder %s11, 3
    %p71 = scmp.ne.s32.totalorder %s66, %s68
    %p72 = scmp.eq.s32.totalorder %s11, 0
    %p73 = por %p71, %p72
    %p74 = scmp.ne.s32.totalorder %s66, %s68
    %p75 = scmp.eq.s32.totalorder %s16, 3
    %p76 = por %p74, %p75
    %p77 = scmp.ne.s32.totalorder %s68, %s69
    %p78 = scmp.eq.s32.totalorder %s16, 0
    %p79 = por %p77, %p78
    %p80 = scmp.ne.s32.totalorder %s68, %s69
    %p81 = scmp.eq.s32.totalorder %s17, 3
    %p82 = por %p80, %p81
    %p84 = scmp.ne.s32.totalorder %s69, %s83
    %p85 = scmp.eq.s32.totalorder %s17, 0
    %p86 = por %p84, %p85
    %s88 = sadd.s32 %s87, 1
    %p91 = scmp.eq.s32.totalorder %s11, 3
    %p92 = scmp.ne.s32.totalorder %s87, %s89
    %p93 = scmp.eq.s32.totalorder %s11, 0
    %p94 = por %p92, %p93
    %p95 = scmp.ne.s32.totalorder %s87, %s89
    %p96 = scmp.eq.s32.totalorder %s16, 3
    %p97 = por %p95, %p96
    %p98 = scmp.ne.s32.totalorder %s89, %s90
    %p99 = scmp.eq.s32.totalorder %s16, 0
    %p100 = por %p98, %p99
    %p101 = scmp.ne.s32.totalorder %s89, %s90
    %p102 = scmp.eq.s32.totalorder %s17, 3
    %p103 = por %p101, %p102
    %p105 = scmp.ne.s32.totalorder %s90, %s104
    %p106 = scmp.eq.s32.totalorder %s17, 0
    %p107 = por %p105, %p106
    %s109 = sadd.s32 %s108, 1
    %p112 = scmp.eq.s32.totalorder %s11, 3
    %p113 = scmp.ne.s32.totalorder %s108, %s110
    %p114 = scmp.eq.s32.totalorder %s11, 0
    %p115 = por %p113, %p114
    %p116 = scmp.ne.s32.totalorder %s108, %s110
    %p117 = scmp.eq.s32.totalorder %s16, 3
    %p118 = por %p116, %p117
    %p119 = scmp.ne.s32.totalorder %s110, %s111
    %p120 = scmp.eq.s32.totalorder %s16, 0
    %p121 = por %p119, %p120
    %p122 = scmp.ne.s32.totalorder %s110, %s111
    %p123 = scmp.eq.s32.totalorder %s17, 3
    %p124 = por %p122, %p123
    %p126 = scmp.ne.s32.totalorder %s111, %s125
    %p127 = scmp.eq.s32.totalorder %s17, 0
    %p128 = por %p126, %p127
    %s129 = ssub.s32 %s11, %s18
    %p130 = scmp.eq.s32.totalorder %s129, 0
    %s132 = sadd.s32 %s131, 1
    %s133 = scalar_select %p130, %s131, %s132
    %p136 = pneg %p130
    %p137 = scmp.eq.s32.totalorder %s11, 3
    %p138 = por %p136, %p137
    %p139 = scmp.ne.s32.totalorder %s131, %s134
    %p140 = scmp.eq.s32.totalorder %s11, 0
    %p141 = por %p139, %p140
    %p142 = scmp.ne.s32.totalorder %s131, %s134
    %p143 = scmp.eq.s32.totalorder %s16, 3
    %p144 = por %p142, %p143
    %p145 = scmp.ne.s32.totalorder %s134, %s135
    %p146 = scmp.eq.s32.totalorder %s16, 0
    %p147 = por %p145, %p146
    %p148 = scmp.ne.s32.totalorder %s134, %s135
    %p149 = scmp.eq.s32.totalorder %s17, 3
    %p150 = por %p148, %p149
    %p152 = scmp.ne.s32.totalorder %s135, %s151
    %p153 = scmp.eq.s32.totalorder %s17, 0
    %p154 = por %p152, %p153
    %p155 = scmp.le.s32.totalorder 1, %s11
    %p156 = scmp.lt.s32.totalorder %s11, 5
    %p157 = pnand %p155, %p156
    %p158 = pneg %p157
    // Predicated region
    $region9: #{_lambda_.1} parent=5 // pred_check
      _
    $region10: #{_lambda_.1} parent=5 // pred_check_branch
      %160 = sbr.rel (%p157) target = $region12
    $region11: #{_lambda_.1} parent=5 // pred_region
      %s161 = ssub.s32 %s11, 1
      // Predicated region
      $region13: #{_lambda_.1} parent=11 // pred_check
        %p162 = pneg %p58
      $region14: #{_lambda_.1} parent=11 // pred_check_branch
        %164 = sbr.rel (%p162) target = $region16
      $region15: #{_lambda_.1} parent=11 // pred_region
        _
      $region16: #{_lambda_.1} parent=11 // pred_fallthru
        _
      // Predicated region
      $region17: #{_lambda_.1} parent=11 // pred_check
        %p165 = pneg %p79
      $region18: #{_lambda_.1} parent=11 // pred_check_branch
        %167 = sbr.rel (%p165) target = $region20
      $region19: #{_lambda_.1} parent=11 // pred_region
        _
      $region20: #{_lambda_.1} parent=11 // pred_fallthru
        _
      // Predicated region
      $region21: #{_lambda_.1} parent=11 // pred_check
        %p168 = pneg %p100
      $region22: #{_lambda_.1} parent=11 // pred_check_branch
        %170 = sbr.rel (%p168) target = $region24
      $region23: #{_lambda_.1} parent=11 // pred_region
        _
      $region24: #{_lambda_.1} parent=11 // pred_fallthru
        _
      // Predicated region
      $region25: #{_lambda_.1} parent=11 // pred_check
        %p171 = pneg %p121
      $region26: #{_lambda_.1} parent=11 // pred_check_branch
        %173 = sbr.rel (%p171) target = $region28
      $region27: #{_lambda_.1} parent=11 // pred_region
        _
      $region28: #{_lambda_.1} parent=11 // pred_fallthru
        _
    $region12: #{_lambda_.1} parent=5 // pred_fallthru
      _
    %p174 = scmp.lt.s32.totalorder %s11, 4
    // Predicated region
    $region29: #{_lambda_.1} parent=5 // pred_check
      %p175 = pneg %p174
    $region30: #{_lambda_.1} parent=5 // pred_check_branch
      %177 = sbr.rel (%p175) target = $region32
    $region31: #{_lambda_.1} parent=5 // pred_region
      // Predicated region
      $region33: #{_lambda_.1} parent=31 // pred_check
        %p178 = pneg %p31
      $region34: #{_lambda_.1} parent=31 // pred_check_branch
        %180 = sbr.rel (%p178) target = $region36
      $region35: #{_lambda_.1} parent=31 // pred_region
        %s181 = smul.u32 16, %s11
        %p182 = scmp.lt.s32.totalorder %s181, 63
        %s183 = scalar_select %p182, %s181, 63
        %s184 = smul.addr %s183, 8
        %s185 = scalar_lea.vmem %s0, %s184
        %s186 = smul.u32 16, %s11
      $region36: #{_lambda_.1} parent=31 // pred_fallthru
        _
    $region32: #{_lambda_.1} parent=5 // pred_fallthru
      _
    %p187 = scmp.le.s32.totalorder 1, %s11
    %p188 = scmp.lt.s32.totalorder %s11, 5
    %p189 = pnand %p187, %p188
    %p190 = pneg %p189
    // Predicated region
    $region37: #{_lambda_.1} parent=5 // pred_check
      _
    $region38: #{_lambda_.1} parent=5 // pred_check_branch
      %192 = sbr.rel (%p189) target = $region40
    $region39: #{_lambda_.1} parent=5 // pred_region
      %s193 = ssub.s32 %s11, 1
      %s194 = smul.u32 16, %s16
      %p195 = scmp.lt.s32.totalorder %s194, 63
      %s196 = scalar_select %p195, %s194, 63
      %s197 = smul.addr %s196, 8
      %s198 = scalar_lea.vmem %s0, %s197
      %p199 = pneg %p37
      %p200 = pneg %p34
      %p201 = pneg %p58
      %p202 = pneg %p55
      %p203 = pneg %p79
      %p204 = pneg %p76
      %p205 = pneg %p100
      %p206 = pneg %p97
      %p207 = pneg %p121
      %p208 = pneg %p118
      %p209 = pneg %p147
      %p210 = pneg %p144
      %s211 = smul.u32 16, %s16
      %p212 = scmp.lt.s32.totalorder %s211, 63
      %s213 = scalar_select %p212, %s211, 63
      %s214 = smul.addr %s213, 8
      %s215 = scalar_lea.vmem %s5, %s214
      %s216 = smul.u32 16, %s16
      %p217 = scmp.lt.s32.totalorder %s216, 63
      %s218 = scalar_select %p217, %s216, 63
      %s219 = smul.addr %s218, 8
      %s220 = scalar_lea.vmem %s0, %s219
      %s221 = smul.u32 16, %s16
      %s222 = smul.u32 16, %s16
      %p223 = scmp.lt.s32.totalorder %s222, 63
      %s224 = scalar_select %p223, %s222, 63
      %s225 = smul.addr %s224, 8
      %s226 = scalar_lea.vmem %s5, %s225
      %s227 = smul.u32 16, %s16
      %v229 = vld [vmem:[%s1] sm:$0xf]
      %v230 = vld [vmem:[%s1 + $0x4] sm:$0xf]
      %v231 = vld [vmem:[%s1 + $0x8] sm:$0xf]
      %v232 = vld [vmem:[%s1 + $0xc] sm:$0xf]
      %v233 = vld [vmem:[%s2] sm:$0x1]
      %v234 = vld [vmem:[%s3] sm:$0xf]
      %v235 = vld [vmem:[%s3 + $0x4] sm:$0xf]
      %v236 = vld [vmem:[%s3 + $0x8] sm:$0xf]
      %v237 = vld [vmem:[%s3 + $0xc] sm:$0xf]
      %v238 = vld [vmem:[%s3 + $0x10] sm:$0xf]
      %v239 = vld [vmem:[%s3 + $0x14] sm:$0xf]
      %v240 = vld [vmem:[%s3 + $0x18] sm:$0xf]
      %v241 = vld [vmem:[%s3 + $0x1c] sm:$0xf]
      %v242 = vld [vmem:[%s4] sm:$0x1]
      %v243 = vld [vmem:[%s220] sm:$0xff]
      %v244 = vld [vmem:[%s220 + $0x8] sm:$0xff]
      %v245 = vld [vmem:[%s220 + $0x10] sm:$0xff]
      %v246 = vld [vmem:[%s220 + $0x18] sm:$0xff]
      %v247 = vld [vmem:[%s220 + $0x20] sm:$0xff]
      %v248 = vld [vmem:[%s220 + $0x28] sm:$0xff]
      %v249 = vld [vmem:[%s220 + $0x30] sm:$0xff]
      %v250 = vld [vmem:[%s220 + $0x38] sm:$0xff]
      %v251 = vld [vmem:[%s220 + $0x40] sm:$0xff]
      %v252 = vld [vmem:[%s220 + $0x48] sm:$0xff]
      %v253 = vld [vmem:[%s220 + $0x50] sm:$0xff]
      %v254 = vld [vmem:[%s220 + $0x58] sm:$0xff]
      %v255 = vld [vmem:[%s220 + $0x60] sm:$0xff]
      %v256 = vld [vmem:[%s220 + $0x68] sm:$0xff]
      %v257 = vld [vmem:[%s220 + $0x70] sm:$0xff]
      %v258 = vld [vmem:[%s220 + $0x78] sm:$0xff]
      %v259 = vpack.c.bf16 %v244, %v243
      %v260 = vpack.c.bf16 %v246, %v245
      %v261 = vpack.c.bf16 %v248, %v247
      %v262 = vpack.c.bf16 %v250, %v249
      %v263 = vpack.c.bf16 %v252, %v251
      %v264 = vpack.c.bf16 %v254, %v253
      %v265 = vpack.c.bf16 %v256, %v255
      %v266 = vpack.c.bf16 %v258, %v257
      %v268 = vlaneseq
      %v269 = vshrl.u32 %v268, 7
      %v270 = vsub.s32 0, %v269
      %v271 = vrot.slane %v233, %v270
      %v277 = vunpack.c.l.b16 %v229
      %v278 = vunpack.c.l.b16 %v230
      %v279 = vunpack.c.l.b16 %v231
      %v280 = vunpack.c.l.b16 %v232
      %v281 = vpack.c.b16 %v278, %v277
      %v282 = vpack.c.b16 %v280, %v279
      %vm285 = vcmask 261120
      %v287 = vsel %vm285, %v259, 0
      %v290 = vsel %vm285, %v260, 0
      %v293 = vsel %vm285, %v261, 0
      %v296 = vsel %vm285, %v262, 0
      %v299 = vsel %vm285, %v263, 0
      %v302 = vsel %vm285, %v264, 0
      %v305 = vsel %vm285, %v265, 0
      %v308 = vsel %vm285, %v266, 0
      %310 = vmatprep.subr.bf16.mxu0 0
      %311 = vmatpush1.bf16.msra.mxu0 0
      %312 = vmatprep.subr.bf16.mxu0 0
      %313 = vmatpush1.bf16.msra.mxu0 0
      %314 = vmatprep.subr.bf16.mxu0 0
      %315 = vmatpush1.bf16.msra.mxu0 0
      %316 = vmatprep.subr.bf16.mxu0 0
      %317 = vmatpush1.bf16.msra.mxu0 0
      %318 = vmatprep.subr.bf16.mxu0 0
      %319 = vmatpush1.bf16.msra.mxu0 0
      %320 = vmatprep.subr.bf16.mxu0 0
      %321 = vmatpush1.bf16.msra.mxu0 0
      %322 = vmatprep.subr.bf16.mxu0 0
      %323 = vmatpush1.bf16.msra.mxu0 %v282
      %324 = vmatprep.subr.bf16.mxu0 0
      %325 = vmatpush1.bf16.msra.mxu0 %v281
      %326 = vmatprep.subr.bf16.mxu0 0
      %327 = vmatpush2.bf16.msra.mxu0 0
      %328 = vmatprep.subr.bf16.mxu0 0
      %329 = vmatpush2.bf16.msra.mxu0 0
      %330 = vmatprep.subr.bf16.mxu0 0
      %331 = vmatpush2.bf16.msra.mxu0 0
      %332 = vmatprep.subr.bf16.mxu0 0
      %333 = vmatpush2.bf16.msra.mxu0 0
      %334 = vmatprep.subr.bf16.mxu0 0
      %335 = vmatpush2.bf16.msra.mxu0 0
      %336 = vmatprep.subr.bf16.mxu0 0
      %337 = vmatpush2.bf16.msra.mxu0 0
      %338 = vmatprep.subr.bf16.mxu0 0
      %339 = vmatpush2.bf16.msra.mxu0 0
      %340 = vmatprep.subr.bf16.mxu0 0
      %341 = vmatpush2.bf16.msra.mxu0 0
      %342 = vmatprep.mubr.bf16.mxu0 0
      %343 = vmatmul.mubr.bf16.gmra.mxu0 %v287
      %v344 = vpop.f32.mrf.mxu0
      %v345 = vadd.f32 %v271, %v344
      %v346 = vpop.f32.mrf.mxu0
      %v347 = vpop.f32.mrf.mxu0
      %v348 = vadd.f32 %v271, %v347
      %v349 = vpop.f32.mrf.mxu0
      %350 = vmatprep.mubr.bf16.mxu0 0
      %351 = vmatmul.mubr.bf16.gmra.mxu0 %v290
      %v352 = vpop.f32.mrf.mxu0
      %v353 = vadd.f32 %v271, %v352
      %v354 = vpop.f32.mrf.mxu0
      %v355 = vpop.f32.mrf.mxu0
      %v356 = vadd.f32 %v271, %v355
      %v357 = vpop.f32.mrf.mxu0
      %358 = vmatprep.mubr.bf16.mxu0 0
      %359 = vmatmul.mubr.bf16.gmra.mxu0 %v293
      %v360 = vpop.f32.mrf.mxu0
      %v361 = vadd.f32 %v271, %v360
      %v362 = vpop.f32.mrf.mxu0
      %v363 = vpop.f32.mrf.mxu0
      %v364 = vadd.f32 %v271, %v363
      %v365 = vpop.f32.mrf.mxu0
      %366 = vmatprep.mubr.bf16.mxu0 0
      %367 = vmatmul.mubr.bf16.gmra.mxu0 %v296
      %v368 = vpop.f32.mrf.mxu0
      %v369 = vadd.f32 %v271, %v368
      %v370 = vpop.f32.mrf.mxu0
      %v371 = vpop.f32.mrf.mxu0
      %v372 = vadd.f32 %v271, %v371
      %v373 = vpop.f32.mrf.mxu0
      %374 = vmatprep.mubr.bf16.mxu0 0
      %375 = vmatmul.mubr.bf16.gmra.mxu0 %v299
      %v376 = vpop.f32.mrf.mxu0
      %v377 = vadd.f32 %v271, %v376
      %v378 = vpop.f32.mrf.mxu0
      %v379 = vpop.f32.mrf.mxu0
      %v380 = vadd.f32 %v271, %v379
      %v381 = vpop.f32.mrf.mxu0
      %382 = vmatprep.mubr.bf16.mxu0 0
      %383 = vmatmul.mubr.bf16.gmra.mxu0 %v302
      %v384 = vpop.f32.mrf.mxu0
      %v385 = vadd.f32 %v271, %v384
      %v386 = vpop.f32.mrf.mxu0
      %v387 = vpop.f32.mrf.mxu0
      %v388 = vadd.f32 %v271, %v387
      %v389 = vpop.f32.mrf.mxu0
      %390 = vmatprep.mubr.bf16.mxu0 0
      %391 = vmatmul.mubr.bf16.gmra.mxu0 %v305
      %v392 = vpop.f32.mrf.mxu0
      %v393 = vadd.f32 %v271, %v392
      %v394 = vpop.f32.mrf.mxu0
      %v395 = vpop.f32.mrf.mxu0
      %v396 = vadd.f32 %v271, %v395
      %v397 = vpop.f32.mrf.mxu0
      %398 = vmatprep.mubr.bf16.mxu0 0
      %399 = vmatmul.mubr.bf16.gmra.mxu0 %v308
      %v400 = vpop.f32.mrf.mxu0
      %v401 = vadd.f32 %v271, %v400
      %v402 = vpop.f32.mrf.mxu0
      %v403 = vpop.f32.mrf.mxu0
      %v404 = vadd.f32 %v271, %v403
      %v405 = vpop.f32.mrf.mxu0
      %406 = vdwg.mxu0
      %v407 = vtanh.pop %v345
      %v408 = vtanh.pop %v348
      %v409 = vtanh.pop %v353
      %v410 = vtanh.pop %v356
      %v411 = vtanh.pop %v361
      %v412 = vtanh.pop %v364
      %v413 = vtanh.pop %v369
      %v414 = vtanh.pop %v372
      %v415 = vtanh.pop %v377
      %v416 = vtanh.pop %v380
      %v417 = vtanh.pop %v385
      %v418 = vtanh.pop %v388
      %v419 = vtanh.pop %v393
      %v420 = vtanh.pop %v396
      %v421 = vtanh.pop %v401
      %v422 = vtanh.pop %v404
      %v423 = vpack.c.bf16 %v408, %v407
      %v424 = vpack.c.bf16 %v410, %v409
      %v425 = vpack.c.bf16 %v412, %v411
      %v426 = vpack.c.bf16 %v414, %v413
      %v427 = vpack.c.bf16 %v416, %v415
      %v428 = vpack.c.bf16 %v418, %v417
      %v429 = vpack.c.bf16 %v420, %v419
      %v430 = vpack.c.bf16 %v422, %v421
      %v432 = vlaneseq
      %v433 = vshrl.u32 %v432, 7
      %v434 = vsub.s32 0, %v433
      %v435 = vrot.slane %v242, %v434
      %v445 = vunpack.c.l.b16 %v234
      %v446 = vunpack.c.l.b16 %v235
      %v447 = vunpack.c.l.b16 %v236
      %v448 = vunpack.c.l.b16 %v237
      %v449 = vunpack.c.l.b16 %v238
      %v450 = vunpack.c.l.b16 %v239
      %v451 = vunpack.c.l.b16 %v240
      %v452 = vunpack.c.l.b16 %v241
      %v453 = vpack.c.b16 %v446, %v445
      %v454 = vpack.c.b16 %v448, %v447
      %v455 = vpack.c.b16 %v450, %v449
      %v456 = vpack.c.b16 %v452, %v451
      %vm461 = vcmask 523264
      %v463 = vsel %vm461, %v423, 0
      %v466 = vsel %vm461, %v424, 0
      %v469 = vsel %vm461, %v425, 0
      %v472 = vsel %vm461, %v426, 0
      %v475 = vsel %vm461, %v427, 0
      %v478 = vsel %vm461, %v428, 0
      %v481 = vsel %vm461, %v429, 0
      %v484 = vsel %vm461, %v430, 0
      %486 = vmatprep.subr.bf16.mxu0 0
      %487 = vmatpush1.bf16.msra.mxu0 0
      %488 = vmatprep.subr.bf16.mxu0 0
      %489 = vmatpush1.bf16.msra.mxu0 0
      %490 = vmatprep.subr.bf16.mxu0 0
      %491 = vmatpush1.bf16.msra.mxu0 0
      %492 = vmatprep.subr.bf16.mxu0 0
      %493 = vmatpush1.bf16.msra.mxu0 0
      %494 = vmatprep.subr.bf16.mxu0 0
      %495 = vmatpush1.bf16.msra.mxu0 %v456
      %496 = vmatprep.subr.bf16.mxu0 0
      %497 = vmatpush1.bf16.msra.mxu0 %v455
      %498 = vmatprep.subr.bf16.mxu0 0
      %499 = vmatpush1.bf16.msra.mxu0 %v454
      %500 = vmatprep.subr.bf16.mxu0 0
      %501 = vmatpush1.bf16.msra.mxu0 %v453
      %502 = vmatprep.subr.bf16.mxu0 0
      %503 = vmatpush2.bf16.msra.mxu0 0
      %504 = vmatprep.subr.bf16.mxu0 0
      %505 = vmatpush2.bf16.msra.mxu0 0
      %506 = vmatprep.subr.bf16.mxu0 0
      %507 = vmatpush2.bf16.msra.mxu0 0
      %508 = vmatprep.subr.bf16.mxu0 0
      %509 = vmatpush2.bf16.msra.mxu0 0
      %510 = vmatprep.subr.bf16.mxu0 0
      %511 = vmatpush2.bf16.msra.mxu0 0
      %512 = vmatprep.subr.bf16.mxu0 0
      %513 = vmatpush2.bf16.msra.mxu0 0
      %514 = vmatprep.subr.bf16.mxu0 0
      %515 = vmatpush2.bf16.msra.mxu0 0
      %516 = vmatprep.subr.bf16.mxu0 0
      %517 = vmatpush2.bf16.msra.mxu0 0
      %518 = vmatprep.mubr.bf16.mxu0 0
      %519 = vmatmul.mubr.bf16.gmra.mxu0 %v463
      %v520 = vpop.f32.mrf.mxu0
      %v521 = vadd.f32 %v435, %v520
      %v522 = vpop.f32.mrf.mxu0
      %v523 = vpop.f32.mrf.mxu0
      %v524 = vadd.f32 %v435, %v523
      %v525 = vpop.f32.mrf.mxu0
      %526 = vmatprep.mubr.bf16.mxu0 0
      %527 = vmatmul.mubr.bf16.gmra.mxu0 %v466
      %v528 = vpop.f32.mrf.mxu0
      %v529 = vadd.f32 %v435, %v528
      %v530 = vpop.f32.mrf.mxu0
      %v531 = vpop.f32.mrf.mxu0
      %v532 = vadd.f32 %v435, %v531
      %v533 = vpop.f32.mrf.mxu0
      %534 = vmatprep.mubr.bf16.mxu0 0
      %535 = vmatmul.mubr.bf16.gmra.mxu0 %v469
      %v536 = vpop.f32.mrf.mxu0
      %v537 = vadd.f32 %v435, %v536
      %v538 = vpop.f32.mrf.mxu0
      %v539 = vpop.f32.mrf.mxu0
      %v540 = vadd.f32 %v435, %v539
      %v541 = vpop.f32.mrf.mxu0
      %542 = vmatprep.mubr.bf16.mxu0 0
      %543 = vmatmul.mubr.bf16.gmra.mxu0 %v472
      %v544 = vpop.f32.mrf.mxu0
      %v545 = vadd.f32 %v435, %v544
      %v546 = vpop.f32.mrf.mxu0
      %v547 = vpop.f32.mrf.mxu0
      %v548 = vadd.f32 %v435, %v547
      %v549 = vpop.f32.mrf.mxu0
      %550 = vmatprep.mubr.bf16.mxu0 0
      %551 = vmatmul.mubr.bf16.gmra.mxu0 %v475
      %v552 = vpop.f32.mrf.mxu0
      %v553 = vadd.f32 %v435, %v552
      %v554 = vpop.f32.mrf.mxu0
      %v555 = vpop.f32.mrf.mxu0
      %v556 = vadd.f32 %v435, %v555
      %v557 = vpop.f32.mrf.mxu0
      %558 = vmatprep.mubr.bf16.mxu0 0
      %559 = vmatmul.mubr.bf16.gmra.mxu0 %v478
      %v560 = vpop.f32.mrf.mxu0
      %v561 = vadd.f32 %v435, %v560
      %v562 = vpop.f32.mrf.mxu0
      %v563 = vpop.f32.mrf.mxu0
      %v564 = vadd.f32 %v435, %v563
      %v565 = vpop.f32.mrf.mxu0
      %566 = vmatprep.mubr.bf16.mxu0 0
      %567 = vmatmul.mubr.bf16.gmra.mxu0 %v481
      %v568 = vpop.f32.mrf.mxu0
      %v569 = vadd.f32 %v435, %v568
      %v570 = vpop.f32.mrf.mxu0
      %v571 = vpop.f32.mrf.mxu0
      %v572 = vadd.f32 %v435, %v571
      %v573 = vpop.f32.mrf.mxu0
      %574 = vmatprep.mubr.bf16.mxu0 0
      %575 = vmatmul.mubr.bf16.gmra.mxu0 %v484
      %v576 = vpop.f32.mrf.mxu0
      %v577 = vadd.f32 %v435, %v576
      %v578 = vpop.f32.mrf.mxu0
      %v579 = vpop.f32.mrf.mxu0
      %v580 = vadd.f32 %v435, %v579
      %v581 = vpop.f32.mrf.mxu0
      %582 = vdwg.mxu0
      %583 = vst.msk [vmem:[%s226] sm:$0xff] %vm285, %v521
      %584 = vst.msk [vmem:[%s226 + $0x8] sm:$0xff] %vm285, %v524
      %585 = vst.msk [vmem:[%s226 + $0x10] sm:$0xff] %vm285, %v529
      %586 = vst.msk [vmem:[%s226 + $0x18] sm:$0xff] %vm285, %v532
      %587 = vst.msk [vmem:[%s226 + $0x20] sm:$0xff] %vm285, %v537
      %588 = vst.msk [vmem:[%s226 + $0x28] sm:$0xff] %vm285, %v540
      %589 = vst.msk [vmem:[%s226 + $0x30] sm:$0xff] %vm285, %v545
      %590 = vst.msk [vmem:[%s226 + $0x38] sm:$0xff] %vm285, %v548
      %591 = vst.msk [vmem:[%s226 + $0x40] sm:$0xff] %vm285, %v553
      %592 = vst.msk [vmem:[%s226 + $0x48] sm:$0xff] %vm285, %v556
      %593 = vst.msk [vmem:[%s226 + $0x50] sm:$0xff] %vm285, %v561
      %594 = vst.msk [vmem:[%s226 + $0x58] sm:$0xff] %vm285, %v564
      %595 = vst.msk [vmem:[%s226 + $0x60] sm:$0xff] %vm285, %v569
      %596 = vst.msk [vmem:[%s226 + $0x68] sm:$0xff] %vm285, %v572
      %597 = vst.msk [vmem:[%s226 + $0x70] sm:$0xff] %vm285, %v577
      %598 = vst.msk [vmem:[%s226 + $0x78] sm:$0xff] %vm285, %v580
      %s599 = smul.u32 16, %s16
      %p600 = scmp.lt.s32.totalorder %s599, 63
      %s601 = scalar_select %p600, %s599, 63
      %s602 = smul.addr %s601, 8
      %s603 = scalar_lea.vmem %s5, %s602
      // Predicated region
      $region41: #{_lambda_.1} parent=39 // pred_check
        %p604 = pneg %p144
      $region42: #{_lambda_.1} parent=39 // pred_check_branch
        %606 = sbr.rel (%p604) target = $region44
      $region43: #{_lambda_.1} parent=39 // pred_region
        %s607 = smul.u32 16, %s16
      $region44: #{_lambda_.1} parent=39 // pred_fallthru
        _
    $region40: #{_lambda_.1} parent=5 // pred_fallthru
      _
    %p608 = scmp.le.s32.totalorder 2, %s11
    // Predicated region
    $region45: #{_lambda_.1} parent=5 // pred_check
      %p609 = pneg %p608
    $region46: #{_lambda_.1} parent=5 // pred_check_branch
      %611 = sbr.rel (%p609) target = $region48
    $region47: #{_lambda_.1} parent=5 // pred_region
      %s612 = ssub.s32 %s11, 2
      // Predicated region
      $region49: #{_lambda_.1} parent=47 // pred_check
        %p613 = pneg %p150
      $region50: #{_lambda_.1} parent=47 // pred_check_branch
        %615 = sbr.rel (%p613) target = $region52
      $region51: #{_lambda_.1} parent=47 // pred_region
        %s616 = smul.u32 16, %s17
        %p617 = scmp.lt.s32.totalorder %s616, 63
        %s618 = scalar_select %p617, %s616, 63
        %s619 = smul.addr %s618, 8
        %s620 = scalar_lea.vmem %s5, %s619
      $region52: #{_lambda_.1} parent=47 // pred_fallthru
        _
    $region48: #{_lambda_.1} parent=5 // pred_fallthru
      _
  $region6: #{_lambda_.1} parent=0 // loop_footer
    %s15 = sadd.s32 1, %s11
  $region7: #{_lambda_.1} parent=0 // loop_footer_branch
    %10 = sbr.rel target = $region3
  $region8: #{_lambda_.1} parent=0 // loop_exit
    _

</llo_original>
